<compile_context>
chip_gen: v6e
topology: v6e:2x2x1
jax: 0.10.0
libtpu: 0.0.40
codegen_flags: <defaults>
</compile_context>

<pallas_src>
import jax
import jax.numpy as jnp
from jax.experimental import pallas as pl
from jax.experimental.pallas import tpu as pltpu


def _make_scale_mul_kernel(c_block):
    def kernel(scale_ref, x_ref, o_ref):
        # scale_ref: full (C, 1), resident in VMEM (constant index_map -> one DMA).
        # x_ref / o_ref: (Cb, HW) slab (batch dim squeezed out).
        ci = pl.program_id(1)
        start = pl.multiple_of(ci * c_block, c_block)
        s = scale_ref[pl.ds(start, c_block), :]          # (Cb, 1), lane broadcast
        o_ref[...] = (s * x_ref[...]).astype(o_ref.dtype)
    return kernel


def _pick_c_block(n, c, hw, itemsize, *,
                  vmem_budget_bytes=12 * 1024 * 1024,
                  min_total_blocks=4):
    """Choose the channel tile Cb.

    Constraints / preferences:
      * Cb is an 8-aligned divisor of C (or full C as a fallback).
      * Bytes cap: double-buffered in+out (~4 * Cb * HW * itemsize) stays under
        `vmem_budget_bytes`, keeping the 2-deep pipeline inside the default
        scoped VMEM on v5e (16 MiB), v6e (32 MiB) and v7x (32 MiB scoped /
        64 MiB physical).
      * Among fitting candidates, pick the largest Cb that still yields at
        least `min_total_blocks` grid steps (so v7x's 2 TensorCores each get
        >=2 balanced blocks at N=1), preferring an even total block count.
        When N is large the total grid is big anyway, so Cb grows toward full
        C and per-step overhead is amortized.
    """
    cands = sorted({cb for cb in range(8, c + 1, 8) if c % cb == 0},
                   reverse=True)
    if not cands:
        # No 8-aligned divisor (odd C): full-dim block is always legal.
        return c

    def fits(cb):
        return 4 * cb * hw * itemsize <= vmem_budget_bytes

    fitting = [cb for cb in cands if fits(cb)] or [min(cands)]

    ok = [cb for cb in fitting if n * (c // cb) >= min_total_blocks]
    if ok:
        even = [cb for cb in ok if (n * (c // cb)) % 2 == 0]
        return max(even) if even else max(ok)
    # Tiny problem: can't reach min_total_blocks even with the smallest tile;
    # just take the largest block that fits (fewest steps).
    return max(fitting)


def layer_scale_mul(scale, x, *, c_block=None):
    """scale: (C, 1, 1); x: (N, C, H, W) -> (N, C, H, W), same dtype as x."""
    n, c, h, w = x.shape
    hw = h * w
    itemsize = jnp.dtype(x.dtype).itemsize
    if c_block is None:
        c_block = _pick_c_block(n, c, hw, itemsize)
    assert c % c_block == 0, (c, c_block)

    x_flat = x.reshape(n, c, hw)
    scale2d = scale.reshape(c, 1)  # keep original dtype; promote inside kernel

    grid = (n, c // c_block)

    cost = pl.CostEstimate(
        flops=n * c * hw,
        bytes_accessed=2 * n * c * hw * itemsize + c * jnp.dtype(scale2d.dtype).itemsize,
        transcendentals=0,
    )

    out = pl.pallas_call(
        _make_scale_mul_kernel(c_block),
        out_shape=jax.ShapeDtypeStruct((n, c, hw), x.dtype),
        grid_spec=pl.GridSpec(
            grid=grid,
            in_specs=[
                # Whole (C, 1) scale, constant block index -> DMA'd once and
                # resident in VMEM for the entire grid (no per-step re-DMA).
                pl.BlockSpec((c, 1), lambda b, cb: (0, 0)),
                # One (Cb, HW) slab of x; batch dim squeezed out of the kernel.
                pl.BlockSpec(
                    (pl.Squeezed(), c_block, hw), lambda b, cb: (b, cb, 0)
                ),
            ],
            out_specs=pl.BlockSpec(
                (pl.Squeezed(), c_block, hw), lambda b, cb: (b, cb, 0)
            ),
        ),
        compiler_params=pltpu.CompilerParams(
            dimension_semantics=("parallel", "parallel"),
        ),
        cost_estimate=cost,
    )(scale2d, x_flat)

    return out.reshape(n, c, h, w)


if __name__ == "__main__":
    # Small shapes consistent with the module's forward:
    # x: (N, C, H, W), layer_scale2: (C, 1, 1). Original used (1, 192, 56, 56);
    # keep C=192 (matches the parameter shape) and shrink spatial/batch.
    N, C, H, W = 2, 192, 16, 16

    key = jax.random.PRNGKey(0)
    k_scale, k_x = jax.random.split(key)
    # torch.rand -> uniform [0, 1); torch.randn -> standard normal
    layer_scale2 = jax.random.uniform(k_scale, (C, 1, 1), dtype=jnp.float32)
    x = jax.random.normal(k_x, (N, C, H, W), dtype=jnp.float32)

    y = layer_scale_mul(layer_scale2, x)
    y = jax.block_until_ready(y)

    # Correctness check against plain-JAX broadcasting reference.
    y_ref = layer_scale2[None, :, :, :] * x
    assert y.shape == x.shape and y.dtype == x.dtype
    assert jnp.allclose(y, y_ref, atol=1e-6, rtol=1e-6)

    # Also sanity-check the production-shape block choice (N=1, C=192, 56x56):
    assert 1 * (192 // _pick_c_block(1, 192, 56 * 56, 4)) >= 4

    print("KERNEL_OK")
</pallas_src>

<mosaic_0001>
module attributes {stable_mosaic.version = 11 : i64} {
  func.func @kernel(%arg0: i32, %arg1: i32, %arg2: memref<192x1xf32, #tpu.memory_space<vmem>>, %arg3: memref<1x96x256xf32, #tpu.memory_space<vmem>>, %arg4: memref<1x96x256xf32, #tpu.memory_space<vmem>>) attributes {dimension_semantics = [#tpu.dimension_semantics<parallel>, #tpu.dimension_semantics<parallel>], iteration_bounds = array<i64: 2, 2>, scalar_prefetch = 0 : i64, scratch_operands = 0 : i64, tpu.core_type = #tpu.core_type<tc>, window_params = [{pipeline_mode = #tpu.pipeline_mode<synchronous>, transform_indices = @transform_0, window_bounds = array<i64: 192, 1>}, {transform_indices = @transform_1, window_bounds = array<i64: 1, 96, 256>}, {transform_indices = @transform_2, window_bounds = array<i64: 1, 96, 256>}]} {
    %c96_i32 = arith.constant 96 : i32
    %0 = arith.muli %arg1, %c96_i32 : i32
    %1 = tpu.assume_multiple %0, 96 : i32
    %2 = arith.index_cast %1 : i32 to index
    %c0 = arith.constant 0 : index
    %3 = vector.load %arg2[%2, %c0] : memref<192x1xf32, #tpu.memory_space<vmem>>, vector<96x1xf32>
    %c0_0 = arith.constant 0 : index
    %c0_1 = arith.constant 0 : index
    %c0_2 = arith.constant 0 : index
    %4 = vector.load %arg3[%c0_0, %c0_1, %c0_2] : memref<1x96x256xf32, #tpu.memory_space<vmem>>, vector<1x96x256xf32>
    %5 = vector.shape_cast %4 : vector<1x96x256xf32> to vector<96x256xf32>
    %6 = vector.broadcast %3 : vector<96x1xf32> to vector<96x256xf32>
    %7 = arith.mulf %6, %5 : vector<96x256xf32>
    %c0_3 = arith.constant 0 : index
    %c0_4 = arith.constant 0 : index
    %c0_5 = arith.constant 0 : index
    %8 = vector.load %arg4[%c0_3, %c0_4, %c0_5] : memref<1x96x256xf32, #tpu.memory_space<vmem>>, vector<1x96x256xf32>
    %9 = vector.shape_cast %8 : vector<1x96x256xf32> to vector<96x256xf32>
    %10 = vector.shape_cast %7 : vector<96x256xf32> to vector<1x96x256xf32>
    tpu.vector_store %arg4[%c0_3, %c0_4, %c0_5], %10 {strides = array<i32>} : memref<1x96x256xf32, #tpu.memory_space<vmem>>, vector<1x96x256xf32>,
    return
  }
  func.func @transform_0(%arg0: i32, %arg1: i32) -> (i32, i32) {
    %c0_i32 = arith.constant 0 : i32
    %c0_i32_0 = arith.constant 0 : i32
    %c0_i32_1 = arith.constant 0 : i32
    return %c0_i32, %c0_i32_0 : i32, i32
  }
  func.func @transform_1(%arg0: i32, %arg1: i32) -> (i32, i32, i32) {
    %c0_i32 = arith.constant 0 : i32
    %c0_i32_0 = arith.constant 0 : i32
    return %arg0, %arg1, %c0_i32 : i32, i32, i32
  }
  func.func @transform_2(%arg0: i32, %arg1: i32) -> (i32, i32, i32) {
    %c0_i32 = arith.constant 0 : i32
    %c0_i32_0 = arith.constant 0 : i32
    return %arg0, %arg1, %c0_i32 : i32, i32, i32
  }
}

</mosaic_0001>

<llo_original>
// kernel: tpu_custom_call.1
$region0: #{tpu_custom_call.1}
  #allocation0 [shape = 'u32[]', space=smem, size = 0x4, offset = 0x4, fixed_abs, tag = 'smem constant byte address 0x4 - core index']
  #allocation1 [shape = 'u32[144,128]{1,0:T(1,128)}', space=vmem, size = 0x12000, scoped, tag = 'internal scratch']
  %s0 = inlined_call_operand.vmem [shape: f32[192,1], index: 0, kind: input, shape index: {}]
  %s1 = inlined_call_operand.hbm [shape: f32[2,192,256], index: 1, kind: input, shape index: {}]
  %s2 = inlined_call_operand.hbm [shape: f32[2,192,256], index: 2, kind: output, shape index: {}]
  %s3 = sld [smem:[#allocation0]]
  $region45: #{tpu_custom_call.1} parent=0
    _
  %s5 = ssub.s32 1, %s3
  %s6 = scalar_select 0, %s5, %s3
  $region1: #{tpu_custom_call.1} parent=0
    #allocation2 [shape = 'u8[196608]{0}', space=vmem, size = 0x30000, scoped, tag = 'input window, operand 1']
    #allocation3 [shape = 's32[2]{0}', space=sflag, size = 0x8, scoped, tag = 'scoped memory for tpu_custom_call.1']
    #allocation4 [shape = 's32[2]{0}', space=sflag, size = 0x8, scoped, tag = 'scoped memory for tpu_custom_call.1']
    #allocation5 [shape = 'u8[196608]{0}', space=vmem, size = 0x30000, scoped, tag = 'output window, operand 0']
    %7 = vsyncpa [#allocation3], 0
    %s8 = scalar_lea.sflag [#allocation3], 1
    %9 = vsyncpa %s8, 0
    %10 = vsyncpa [#allocation4], 0
    %s11 = scalar_lea.sflag [#allocation4], 1
    %12 = vsyncpa %s11, 0
    loop: start=0, step=1, limit=6
    $region2: #{tpu_custom_call.1} parent=1 // loop_pre_header
      _
    $region3: #{tpu_custom_call.1} parent=1 // loop_header
      %s14 = sphi 0, %s18
      %p15 = scmp.ge.s32.totalorder %s14, 6
      %s21 = sphi 0, %s33
      %s22 = sphi 0, %s29
      %s23 = sphi 0, %s21
      %s24 = sphi 0, %s22
      %s25 = sphi 0, %s23
      %s26 = sphi 0, %s24
      %s34 = sphi 0, %s34
      %s36 = sphi 0, %s34
      %s37 = sphi 0, %s36
      %s51 = sphi 0, %s37
      %s59 = sphi 0, %s61
      %s62 = sphi 0, %s59
      %s63 = sphi 0, %s62
      %s79 = sphi 0, %s63
      %s87 = sphi 0, %s89
      %s90 = sphi 0, %s87
      %s91 = sphi 0, %s90
      %s107 = sphi 0, %s91
    $region4: #{tpu_custom_call.1} parent=1 // loop_header_branch
      %17 = sbr.rel (%p15) target = $region8
    $region5: #{tpu_custom_call.1} parent=1 // loop_body
      %s19 = ssub.s32 %s14, 1
      %s20 = ssub.s32 %s14, 2
      %s27 = sadd.s32 1, %s22
      %p28 = scmp.ge.s32.totalorder %s27, 2
      %s29 = scalar_select %p28, 0, %s27
      %s30 = sadd.s32 1, %s21
      %s31 = scalar_select %p28, %s30, %s21
      %p32 = scmp.ge.s32.totalorder %s31, 2
      %s33 = scalar_select %p32, 0, %s31
      %s35 = sadd.s32 %s34, 1
      %p38 = scmp.eq.s32.totalorder %s14, 3
      %p39 = scmp.ne.s32.totalorder %s34, %s36
      %p40 = scmp.eq.s32.totalorder %s14, 0
      %p41 = por %p39, %p40
      %p42 = scmp.ne.s32.totalorder %s34, %s36
      %p43 = scmp.eq.s32.totalorder %s19, 3
      %p44 = por %p42, %p43
      %p45 = scmp.ne.s32.totalorder %s36, %s37
      %p46 = scmp.eq.s32.totalorder %s19, 0
      %p47 = por %p45, %p46
      %p48 = scmp.ne.s32.totalorder %s36, %s37
      %p49 = scmp.eq.s32.totalorder %s20, 3
      %p50 = por %p48, %p49
      %p52 = scmp.ne.s32.totalorder %s37, %s51
      %p53 = scmp.eq.s32.totalorder %s20, 0
      %p54 = por %p52, %p53
      %s55 = ssub.s32 %s21, %s33
      %s56 = ssub.s32 %s22, %s29
      %s57 = sor.u32 %s55, %s56
      %p58 = scmp.eq.s32.totalorder %s57, 0
      %s60 = sadd.s32 %s59, 1
      %s61 = scalar_select %p58, %s59, %s60
      %p64 = pneg %p58
      %p65 = scmp.eq.s32.totalorder %s14, 3
      %p66 = por %p64, %p65
      %p67 = scmp.ne.s32.totalorder %s59, %s62
      %p68 = scmp.eq.s32.totalorder %s14, 0
      %p69 = por %p67, %p68
      %p70 = scmp.ne.s32.totalorder %s59, %s62
      %p71 = scmp.eq.s32.totalorder %s19, 3
      %p72 = por %p70, %p71
      %p73 = scmp.ne.s32.totalorder %s62, %s63
      %p74 = scmp.eq.s32.totalorder %s19, 0
      %p75 = por %p73, %p74
      %p76 = scmp.ne.s32.totalorder %s62, %s63
      %p77 = scmp.eq.s32.totalorder %s20, 3
      %p78 = por %p76, %p77
      %p80 = scmp.ne.s32.totalorder %s63, %s79
      %p81 = scmp.eq.s32.totalorder %s20, 0
      %p82 = por %p80, %p81
      %s83 = ssub.s32 %s21, %s33
      %s84 = ssub.s32 %s22, %s29
      %s85 = sor.u32 %s83, %s84
      %p86 = scmp.eq.s32.totalorder %s85, 0
      %s88 = sadd.s32 %s87, 1
      %s89 = scalar_select %p86, %s87, %s88
      %p92 = pneg %p86
      %p93 = scmp.eq.s32.totalorder %s14, 3
      %p94 = por %p92, %p93
      %p95 = scmp.ne.s32.totalorder %s87, %s90
      %p96 = scmp.eq.s32.totalorder %s14, 0
      %p97 = por %p95, %p96
      %p98 = scmp.ne.s32.totalorder %s87, %s90
      %p99 = scmp.eq.s32.totalorder %s19, 3
      %p100 = por %p98, %p99
      %p101 = scmp.ne.s32.totalorder %s90, %s91
      %p102 = scmp.eq.s32.totalorder %s19, 0
      %p103 = por %p101, %p102
      %p104 = scmp.ne.s32.totalorder %s90, %s91
      %p105 = scmp.eq.s32.totalorder %s20, 3
      %p106 = por %p104, %p105
      %p108 = scmp.ne.s32.totalorder %s91, %s107
      %p109 = scmp.eq.s32.totalorder %s20, 0
      %p110 = por %p108, %p109
      %p111 = scmp.le.s32.totalorder 1, %s14
      %p112 = scmp.lt.s32.totalorder %s14, 5
      %p113 = pnand %p111, %p112
      %p114 = pneg %p113
      // Predicated region
      $region9: #{tpu_custom_call.1} parent=5 // pred_check
        _
      $region10: #{tpu_custom_call.1} parent=5 // pred_check_branch
        %116 = sbr.rel (%p113) target = $region12
      $region11: #{tpu_custom_call.1} parent=5 // pred_region
        %s117 = ssub.s32 %s14, 1
        // Predicated region
        $region13: #{tpu_custom_call.1} parent=11 // pred_check
          %p118 = pneg %p47
        $region14: #{tpu_custom_call.1} parent=11 // pred_check_branch
          %120 = sbr.rel (%p118) target = $region16
        $region15: #{tpu_custom_call.1} parent=11 // pred_region
          _
        $region16: #{tpu_custom_call.1} parent=11 // pred_fallthru
          _
      $region12: #{tpu_custom_call.1} parent=5 // pred_fallthru
        _
      %p121 = scmp.lt.s32.totalorder %s14, 4
      // Predicated region
      $region17: #{tpu_custom_call.1} parent=5 // pred_check
        %p122 = pneg %p121
      $region18: #{tpu_custom_call.1} parent=5 // pred_check_branch
        %124 = sbr.rel (%p122) target = $region20
      $region19: #{tpu_custom_call.1} parent=5 // pred_region
        // Predicated region
        $region21: #{tpu_custom_call.1} parent=19 // pred_check
          %p125 = pneg %p69
        $region22: #{tpu_custom_call.1} parent=19 // pred_check_branch
          %127 = sbr.rel (%p125) target = $region24
        $region23: #{tpu_custom_call.1} parent=19 // pred_region
          %s128 = sand.u32 %s59, 1
          %s129 = scalar_lea.sflag [#allocation3], %s128
          %s130 = sand.u32 %s59, 1
          %s131 = smul.addr %s130, 192
          %s132 = scalar_lea.vmem [#allocation2], %s131
          %s133 = smul.u32 12, %s22
          %s135 = ssub.s32 3072, 3072
          %136 = vsyncadd %s129, %s135
          %s137 = smul.addr %s133, 2
          %s138 = smul.addr %s21, 48
          %s139 = sadd.s32 %s137, %s138
          %s140 = smul.addr %s139, 128
          %s141 = scalar_lea.hbm %s1, %s140
          %s142 = sshll.u32 %s132, 4
          %s143 = int_to_ptr.vmem [resolvable:$true] %s142
          %148 = dma.hbm_to_vmem [thread:$0]  %s141, 3072, %s143, %s129, 256, 256, 16
        $region24: #{tpu_custom_call.1} parent=19 // pred_fallthru
          _
      $region20: #{tpu_custom_call.1} parent=5 // pred_fallthru
        _
      %p149 = scmp.le.s32.totalorder 1, %s14
      %p150 = scmp.lt.s32.totalorder %s14, 5
      %p151 = pnand %p149, %p150
      %p152 = pneg %p151
      // Predicated region
      $region25: #{tpu_custom_call.1} parent=5 // pred_check
        _
      $region26: #{tpu_custom_call.1} parent=5 // pred_check_branch
        %154 = sbr.rel (%p151) target = $region28
      $region27: #{tpu_custom_call.1} parent=5 // pred_region
        %s155 = ssub.s32 %s14, 1
        %s156 = sand.u32 %s62, 1
        %s157 = scalar_lea.sflag [#allocation3], %s156
        %s158 = sand.u32 %s62, 1
        %s159 = smul.addr %s158, 192
        %s160 = scalar_lea.vmem [#allocation2], %s159
        // Predicated region
        $region29: #{tpu_custom_call.1} parent=27 // pred_check
          %p161 = pneg %p75
        $region30: #{tpu_custom_call.1} parent=27 // pred_check_branch
          %163 = sbr.rel (%p161) target = $region32
        $region31: #{tpu_custom_call.1} parent=27 // pred_region
          %164 = dma.done %s157, 3072
        $region32: #{tpu_custom_call.1} parent=27 // pred_fallthru
          _
        %p165 = pneg %p47
        %p166 = pneg %p44
        %s167 = sand.u32 %s62, 1
        %s168 = scalar_lea.sflag [#allocation3], %s167
        %s169 = sand.u32 %s62, 1
        %s170 = smul.addr %s169, 192
        %s171 = scalar_lea.vmem [#allocation2], %s170
        %p172 = pneg %p75
        %p173 = pneg %p72
        %p174 = pneg %p103
        %p175 = pneg %p100
        %s176 = sand.u32 %s90, 1
        %s177 = scalar_lea.sflag [#allocation4], %s176
        %s178 = sand.u32 %s90, 1
        %s179 = smul.addr %s178, 192
        %s180 = scalar_lea.vmem [#allocation5], %s179
        %s181 = smul.u32 12, %s24
        %s182 = smul.u32 12, %s24
        %s183 = smul.u32 %s24, 96
        %s184 = scalar_lea.vmem %s0, %s183
        %v185 = vld [vmem:[%s184] sm:$0xff]
        %v186 = vld [vmem:[%s184 + $0x8] sm:$0xff]
        %v187 = vld [vmem:[%s184 + $0x10] sm:$0xff]
        %v188 = vld [vmem:[%s184 + $0x18] sm:$0xff]
        %v189 = vld [vmem:[%s184 + $0x20] sm:$0xff]
        %v190 = vld [vmem:[%s184 + $0x28] sm:$0xff]
        %v191 = vld [vmem:[%s184 + $0x30] sm:$0xff]
        %v192 = vld [vmem:[%s184 + $0x38] sm:$0xff]
        %v193 = vld [vmem:[%s184 + $0x40] sm:$0xff]
        %v194 = vld [vmem:[%s184 + $0x48] sm:$0xff]
        %v195 = vld [vmem:[%s184 + $0x50] sm:$0xff]
        %v196 = vld [vmem:[%s184 + $0x58] sm:$0xff]
        %v197 = vld [vmem:[%s160] sm:$0xff]
        %v198 = vld [vmem:[%s160 + $0x8] sm:$0xff]
        %v199 = vld [vmem:[%s160 + $0x10] sm:$0xff]
        %v200 = vld [vmem:[%s160 + $0x18] sm:$0xff]
        %v201 = vld [vmem:[%s160 + $0x20] sm:$0xff]
        %v202 = vld [vmem:[%s160 + $0x28] sm:$0xff]
        %v203 = vld [vmem:[%s160 + $0x30] sm:$0xff]
        %v204 = vld [vmem:[%s160 + $0x38] sm:$0xff]
        %v205 = vld [vmem:[%s160 + $0x40] sm:$0xff]
        %v206 = vld [vmem:[%s160 + $0x48] sm:$0xff]
        %v207 = vld [vmem:[%s160 + $0x50] sm:$0xff]
        %v208 = vld [vmem:[%s160 + $0x58] sm:$0xff]
        %v209 = vld [vmem:[%s160 + $0x60] sm:$0xff]
        %v210 = vld [vmem:[%s160 + $0x68] sm:$0xff]
        %v211 = vld [vmem:[%s160 + $0x70] sm:$0xff]
        %v212 = vld [vmem:[%s160 + $0x78] sm:$0xff]
        %v213 = vld [vmem:[%s160 + $0x80] sm:$0xff]
        %v214 = vld [vmem:[%s160 + $0x88] sm:$0xff]
        %v215 = vld [vmem:[%s160 + $0x90] sm:$0xff]
        %v216 = vld [vmem:[%s160 + $0x98] sm:$0xff]
        %v217 = vld [vmem:[%s160 + $0xa0] sm:$0xff]
        %v218 = vld [vmem:[%s160 + $0xa8] sm:$0xff]
        %v219 = vld [vmem:[%s160 + $0xb0] sm:$0xff]
        %v220 = vld [vmem:[%s160 + $0xb8] sm:$0xff]
        %222 = vset.pattern.permute.xlu0 0
        %223 = vperm.xlu0 %222, %v185
        %v224 = vpop.permute.xlu0 %223
        %227 = vset.pattern.permute.xlu0 0
        %228 = vperm.xlu0 %227, %v186
        %v229 = vpop.permute.xlu0 %228
        %232 = vset.pattern.permute.xlu0 0
        %233 = vperm.xlu0 %232, %v187
        %v234 = vpop.permute.xlu0 %233
        %237 = vset.pattern.permute.xlu0 0
        %238 = vperm.xlu0 %237, %v188
        %v239 = vpop.permute.xlu0 %238
        %242 = vset.pattern.permute.xlu0 0
        %243 = vperm.xlu0 %242, %v189
        %v244 = vpop.permute.xlu0 %243
        %247 = vset.pattern.permute.xlu0 0
        %248 = vperm.xlu0 %247, %v190
        %v249 = vpop.permute.xlu0 %248
        %252 = vset.pattern.permute.xlu0 0
        %253 = vperm.xlu0 %252, %v191
        %v254 = vpop.permute.xlu0 %253
        %257 = vset.pattern.permute.xlu0 0
        %258 = vperm.xlu0 %257, %v192
        %v259 = vpop.permute.xlu0 %258
        %262 = vset.pattern.permute.xlu0 0
        %263 = vperm.xlu0 %262, %v193
        %v264 = vpop.permute.xlu0 %263
        %267 = vset.pattern.permute.xlu0 0
        %268 = vperm.xlu0 %267, %v194
        %v269 = vpop.permute.xlu0 %268
        %272 = vset.pattern.permute.xlu0 0
        %273 = vperm.xlu0 %272, %v195
        %v274 = vpop.permute.xlu0 %273
        %277 = vset.pattern.permute.xlu0 0
        %278 = vperm.xlu0 %277, %v196
        %v279 = vpop.permute.xlu0 %278
        %v281 = vmul.f32 %v224, %v197
        %v282 = vmul.f32 %v224, %v198
        %v283 = vmul.f32 %v229, %v199
        %v284 = vmul.f32 %v229, %v200
        %v285 = vmul.f32 %v234, %v201
        %v286 = vmul.f32 %v234, %v202
        %v287 = vmul.f32 %v239, %v203
        %v288 = vmul.f32 %v239, %v204
        %v289 = vmul.f32 %v244, %v205
        %v290 = vmul.f32 %v244, %v206
        %v291 = vmul.f32 %v249, %v207
        %v292 = vmul.f32 %v249, %v208
        %v293 = vmul.f32 %v254, %v209
        %v294 = vmul.f32 %v254, %v210
        %v295 = vmul.f32 %v259, %v211
        %v296 = vmul.f32 %v259, %v212
        %v297 = vmul.f32 %v264, %v213
        %v298 = vmul.f32 %v264, %v214
        %v299 = vmul.f32 %v269, %v215
        %v300 = vmul.f32 %v269, %v216
        %v301 = vmul.f32 %v274, %v217
        %v302 = vmul.f32 %v274, %v218
        %v303 = vmul.f32 %v279, %v219
        %v304 = vmul.f32 %v279, %v220
        %305 = vst [vmem:[%s180] sm:$0xff] %v281
        %306 = vst [vmem:[%s180 + $0x8] sm:$0xff] %v282
        %307 = vst [vmem:[%s180 + $0x10] sm:$0xff] %v283
        %308 = vst [vmem:[%s180 + $0x18] sm:$0xff] %v284
        %309 = vst [vmem:[%s180 + $0x20] sm:$0xff] %v285
        %310 = vst [vmem:[%s180 + $0x28] sm:$0xff] %v286
        %311 = vst [vmem:[%s180 + $0x30] sm:$0xff] %v287
        %312 = vst [vmem:[%s180 + $0x38] sm:$0xff] %v288
        %313 = vst [vmem:[%s180 + $0x40] sm:$0xff] %v289
        %314 = vst [vmem:[%s180 + $0x48] sm:$0xff] %v290
        %315 = vst [vmem:[%s180 + $0x50] sm:$0xff] %v291
        %316 = vst [vmem:[%s180 + $0x58] sm:$0xff] %v292
        %317 = vst [vmem:[%s180 + $0x60] sm:$0xff] %v293
        %318 = vst [vmem:[%s180 + $0x68] sm:$0xff] %v294
        %319 = vst [vmem:[%s180 + $0x70] sm:$0xff] %v295
        %320 = vst [vmem:[%s180 + $0x78] sm:$0xff] %v296
        %321 = vst [vmem:[%s180 + $0x80] sm:$0xff] %v297
        %322 = vst [vmem:[%s180 + $0x88] sm:$0xff] %v298
        %323 = vst [vmem:[%s180 + $0x90] sm:$0xff] %v299
        %324 = vst [vmem:[%s180 + $0x98] sm:$0xff] %v300
        %325 = vst [vmem:[%s180 + $0xa0] sm:$0xff] %v301
        %326 = vst [vmem:[%s180 + $0xa8] sm:$0xff] %v302
        %327 = vst [vmem:[%s180 + $0xb0] sm:$0xff] %v303
        %328 = vst [vmem:[%s180 + $0xb8] sm:$0xff] %v304
        %s329 = sand.u32 %s90, 1
        %s330 = scalar_lea.sflag [#allocation4], %s329
        %s331 = sand.u32 %s90, 1
        %s332 = smul.addr %s331, 192
        %s333 = scalar_lea.vmem [#allocation5], %s332
        // Predicated region
        $region33: #{tpu_custom_call.1} parent=27 // pred_check
          %p334 = pneg %p100
        $region34: #{tpu_custom_call.1} parent=27 // pred_check_branch
          %336 = sbr.rel (%p334) target = $region36
        $region35: #{tpu_custom_call.1} parent=27 // pred_region
          %s337 = smul.u32 12, %s24
          %s339 = ssub.s32 3072, 3072
          %340 = vsyncadd %s330, %s339
          %s341 = smul.addr %s337, 2
          %s342 = smul.addr %s23, 48
          %s343 = sadd.s32 %s341, %s342
          %s344 = smul.addr %s343, 128
          %s345 = scalar_lea.hbm %s2, %s344
          %s346 = sshll.u32 %s333, 4
          %s347 = int_to_ptr.vmem [resolvable:$true] %s346
          %352 = dma.vmem_to_hbm [thread:$0]  %s347, 3072, %s345, %s330, 256, 256, 16
        $region36: #{tpu_custom_call.1} parent=27 // pred_fallthru
          _
      $region28: #{tpu_custom_call.1} parent=5 // pred_fallthru
        _
      %p353 = scmp.le.s32.totalorder 2, %s14
      // Predicated region
      $region37: #{tpu_custom_call.1} parent=5 // pred_check
        %p354 = pneg %p353
      $region38: #{tpu_custom_call.1} parent=5 // pred_check_branch
        %356 = sbr.rel (%p354) target = $region40
      $region39: #{tpu_custom_call.1} parent=5 // pred_region
        %s357 = ssub.s32 %s14, 2
        // Predicated region
        $region41: #{tpu_custom_call.1} parent=39 // pred_check
          %p358 = pneg %p106
        $region42: #{tpu_custom_call.1} parent=39 // pred_check_branch
          %360 = sbr.rel (%p358) target = $region44
        $region43: #{tpu_custom_call.1} parent=39 // pred_region
          %s361 = sand.u32 %s91, 1
          %s362 = scalar_lea.sflag [#allocation4], %s361
          %s363 = sand.u32 %s91, 1
          %s364 = smul.addr %s363, 192
          %s365 = scalar_lea.vmem [#allocation5], %s364
          %366 = dma.done %s362, 3072
        $region44: #{tpu_custom_call.1} parent=39 // pred_fallthru
          _
      $region40: #{tpu_custom_call.1} parent=5 // pred_fallthru
        _
    $region6: #{tpu_custom_call.1} parent=1 // loop_footer
      %s18 = sadd.s32 1, %s14
    $region7: #{tpu_custom_call.1} parent=1 // loop_footer_branch
      %13 = sbr.rel target = $region3
    $region8: #{tpu_custom_call.1} parent=1 // loop_exit
      _
    %367 = vsyncpa [#allocation3], 1
    %s368 = scalar_lea.sflag [#allocation3], 1
    %369 = vsyncpa %s368, 1
    %370 = vsyncpa [#allocation4], 1
    %s371 = scalar_lea.sflag [#allocation4], 1
    %372 = vsyncpa %s371, 1

</llo_original>
